<compile_context>
chip_gen: v6e
topology: v6e:2x2x1
jax: 0.10.0
libtpu: 0.0.40
codegen_flags: <defaults>
</compile_context>

<pallas_src>
import functools

import jax
import jax.numpy as jnp
import numpy as np
from jax.experimental import pallas as pl
from jax.experimental.pallas import tpu as pltpu


def _gradient_kernel(x_ref, out_ref, *, H, W):
    # x_ref  : (B, C, HW)   HW = H*W in the lane dim (lane-dense)
    # out_ref: (B, O, HW)
    B, C, HW = x_ref.shape
    O = out_ref.shape[1]

    # Channel reduction in f32 (small C; VPU adds / sublane reduce).
    s = jnp.sum(x_ref[...].astype(jnp.float32), axis=1)            # (B, HW)

    # Flattened pixel index k = h*W + w, shared by all batch rows.
    k = jax.lax.broadcasted_iota(jnp.int32, (1, HW), 1)
    if W & (W - 1) == 0:                                            # power of two
        w_idx = jax.lax.bitwise_and(k, W - 1)
    else:
        w_idx = jax.lax.rem(k, W)

    zero = jnp.zeros_like(s)

    # grad_x(h, w) = s(h+1, w) - s(h-1, w): +-W lane rotations + row-edge masks.
    up = jnp.where(k >= (H - 1) * W, zero, pltpu.roll(s, shift=HW - W, axis=1))   # s[k+W]
    down = jnp.where(k < W, zero, pltpu.roll(s, shift=W, axis=1))                 # s[k-W]
    gx = up - down

    # grad_y(h, w) = s(h, w+1) - s(h, w-1): +-1 lane rotations + column-edge
    # masks (the masks also cancel the circular wrap across row boundaries).
    right = jnp.where(w_idx == W - 1, zero, pltpu.roll(s, shift=HW - 1, axis=1))  # s[k+1]
    left = jnp.where(w_idx == 0, zero, pltpu.roll(s, shift=1, axis=1))            # s[k-1]
    gy = right - left

    grad = jnp.sqrt(gx * gx + gy * gy).astype(out_ref.dtype)        # (B, HW)

    # Every output channel is identical -> one contiguous lane-dense store.
    out_ref[...] = jnp.broadcast_to(grad[:, None, :], (B, O, HW))


def gradient_loss_v1(x_nchw, outdim, *, target_block_bytes=512 * 1024):
    """Forward pass of GradientLoss_v1.

    x_nchw: (N, C, H, W) input (PyTorch NCHW layout).
    Returns (N, outdim, H, W).
    """
    N, C, H, W = x_nchw.shape
    O = int(outdim)
    HW = H * W

    x_flat = x_nchw.reshape(N, C, HW)          # free, contiguous NCHW reshape
    itemsize = jnp.dtype(x_nchw.dtype).itemsize
    per_image = (C + O) * HW * itemsize

    # Batch several images per grid step (amortize ~0.35us/step overhead);
    # B is forced to divide N so blocks are never ragged.
    B = max(1, min(N, target_block_bytes // max(per_image, 1)))
    while N % B:
        B -= 1
    grid_n = N // B

    cost = pl.CostEstimate(
        flops=N * HW * (C + 6),                # channel sum + diffs + squares
        transcendentals=N * HW,                # sqrt
        bytes_accessed=N * per_image,
    )

    out_flat = pl.pallas_call(
        functools.partial(_gradient_kernel, H=H, W=W),
        out_shape=jax.ShapeDtypeStruct((N, O, HW), x_nchw.dtype),
        grid=(grid_n,),
        in_specs=[pl.BlockSpec((B, C, HW), lambda n: (n, 0, 0))],
        out_specs=pl.BlockSpec((B, O, HW), lambda n: (n, 0, 0)),
        compiler_params=pltpu.CompilerParams(
            dimension_semantics=("parallel",)),
        cost_estimate=cost,
    )(x_flat)
    return out_flat.reshape(N, O, H, W)


def _reference(x, wx, wy):
    dn = ('NCHW', 'OIHW', 'NCHW')
    gx = jax.lax.conv_general_dilated(x, wx, (1, 1), 'SAME', dimension_numbers=dn)
    gy = jax.lax.conv_general_dilated(x, wy, (1, 1), 'SAME', dimension_numbers=dn)
    return jnp.sqrt(gx * gx + gy * gy)


if __name__ == "__main__":
    N, C, H, W, O = 2, 4, 16, 16, 8            # indim=C, outdim=O

    key = jax.random.PRNGKey(0)
    x = jax.random.normal(key, (N, C, H, W), jnp.float32)

    out = jax.block_until_ready(gradient_loss_v1(x, O))

    # Reference built exactly like GradientLoss_v1.__init__: every (out, in)
    # slice of each conv weight is the fixed 3x3 kernel.
    x_kernel = jnp.array([[0., -1., 0.],
                          [0.,  0., 0.],
                          [0.,  1., 0.]], jnp.float32)
    y_kernel = jnp.array([[0., 0., 0.],
                          [-1., 0., 1.],
                          [0., 0., 0.]], jnp.float32)
    wx = jnp.broadcast_to(x_kernel, (O, C, 3, 3)).astype(jnp.float32)
    wy = jnp.broadcast_to(y_kernel, (O, C, 3, 3)).astype(jnp.float32)

    ref = jax.block_until_ready(_reference(x, wx, wy))
    np.testing.assert_allclose(np.asarray(out), np.asarray(ref),
                               rtol=1e-4, atol=1e-4)

    print("KERNEL_OK")
</pallas_src>

<mosaic_0001>
module attributes {stable_mosaic.version = 11 : i64} {
  func.func @_gradient_kernel(%arg0: i32, %arg1: memref<2x4x256xf32, #tpu.memory_space<vmem>>, %arg2: memref<2x8x256xf32, #tpu.memory_space<vmem>>) attributes {dimension_semantics = [#tpu.dimension_semantics<parallel>], iteration_bounds = array<i64: 1>, scalar_prefetch = 0 : i64, scratch_operands = 0 : i64, tpu.core_type = #tpu.core_type<tc>, window_params = [{transform_indices = @transform_0, window_bounds = array<i64: 2, 4, 256>}, {transform_indices = @transform_1, window_bounds = array<i64: 2, 8, 256>}]} {
    %c0 = arith.constant 0 : index
    %c0_0 = arith.constant 0 : index
    %c0_1 = arith.constant 0 : index
    %0 = vector.load %arg1[%c0, %c0_0, %c0_1] : memref<2x4x256xf32, #tpu.memory_space<vmem>>, vector<2x4x256xf32>
    %cst = arith.constant dense<0.000000e+00> : vector<2x256xf32>
    %1 = vector.multi_reduction <add>, %0, %cst [1] : vector<2x4x256xf32> to vector<2x256xf32>
    %2 = tpu.iota {dimensions = array<i32: 1>} : vector<1x256xi32>
    %c15_i32 = arith.constant 15 : i32
    %3 = vector.broadcast %c15_i32 : i32 to vector<1x256xi32>
    %4 = arith.andi %2, %3 : vector<1x256xi32>
    %cst_2 = arith.constant 0.000000e+00 : f32
    %5 = vector.broadcast %cst_2 : f32 to vector<2x256xf32>
    %c240_i32 = arith.constant 240 : i32
    %6 = vector.broadcast %c240_i32 : i32 to vector<1x256xi32>
    %7 = arith.cmpi sge, %2, %6 : vector<1x256xi32>
    %c240_i32_3 = arith.constant 240 : i32
    %8 = tpu.dynamic_rotate %1 by %c240_i32_3 dim 1 : vector<2x256xf32>, i32 -> vector<2x256xf32>
    %9 = vector.shape_cast %7 : vector<1x256xi1> to vector<1x256xi1>
    %10 = vector.broadcast %9 : vector<1x256xi1> to vector<2x256xi1>
    %11 = arith.select %10, %5, %8 : vector<2x256xi1>, vector<2x256xf32>
    %c16_i32 = arith.constant 16 : i32
    %12 = vector.broadcast %c16_i32 : i32 to vector<1x256xi32>
    %13 = arith.cmpi slt, %2, %12 : vector<1x256xi32>
    %c16_i32_4 = arith.constant 16 : i32
    %14 = tpu.dynamic_rotate %1 by %c16_i32_4 dim 1 : vector<2x256xf32>, i32 -> vector<2x256xf32>
    %15 = vector.shape_cast %13 : vector<1x256xi1> to vector<1x256xi1>
    %16 = vector.broadcast %15 : vector<1x256xi1> to vector<2x256xi1>
    %17 = arith.select %16, %5, %14 : vector<2x256xi1>, vector<2x256xf32>
    %18 = arith.subf %11, %17 : vector<2x256xf32>
    %c15_i32_5 = arith.constant 15 : i32
    %19 = vector.broadcast %c15_i32_5 : i32 to vector<1x256xi32>
    %20 = arith.cmpi eq, %4, %19 : vector<1x256xi32>
    %c255_i32 = arith.constant 255 : i32
    %21 = tpu.dynamic_rotate %1 by %c255_i32 dim 1 : vector<2x256xf32>, i32 -> vector<2x256xf32>
    %22 = vector.shape_cast %20 : vector<1x256xi1> to vector<1x256xi1>
    %23 = vector.broadcast %22 : vector<1x256xi1> to vector<2x256xi1>
    %24 = arith.select %23, %5, %21 : vector<2x256xi1>, vector<2x256xf32>
    %c0_i32 = arith.constant 0 : i32
    %25 = vector.broadcast %c0_i32 : i32 to vector<1x256xi32>
    %26 = arith.cmpi eq, %4, %25 : vector<1x256xi32>
    %c1_i32 = arith.constant 1 : i32
    %27 = tpu.dynamic_rotate %1 by %c1_i32 dim 1 : vector<2x256xf32>, i32 -> vector<2x256xf32>
    %28 = vector.shape_cast %26 : vector<1x256xi1> to vector<1x256xi1>
    %29 = vector.broadcast %28 : vector<1x256xi1> to vector<2x256xi1>
    %30 = arith.select %29, %5, %27 : vector<2x256xi1>, vector<2x256xf32>
    %31 = arith.subf %24, %30 : vector<2x256xf32>
    %32 = arith.mulf %18, %18 : vector<2x256xf32>
    %33 = arith.mulf %31, %31 : vector<2x256xf32>
    %34 = arith.addf %32, %33 : vector<2x256xf32>
    %35 = math.sqrt %34 : vector<2x256xf32>
    %36 = vector.shape_cast %35 : vector<2x256xf32> to vector<2x1x256xf32>
    %37 = vector.shape_cast %36 : vector<2x1x256xf32> to vector<2x1x256xf32>
    %38 = vector.broadcast %37 : vector<2x1x256xf32> to vector<2x8x256xf32>
    %c0_6 = arith.constant 0 : index
    %c0_7 = arith.constant 0 : index
    %c0_8 = arith.constant 0 : index
    %39 = vector.load %arg2[%c0_6, %c0_7, %c0_8] : memref<2x8x256xf32, #tpu.memory_space<vmem>>, vector<2x8x256xf32>
    tpu.vector_store %arg2[%c0_6, %c0_7, %c0_8], %38 {strides = array<i32>} : memref<2x8x256xf32, #tpu.memory_space<vmem>>, vector<2x8x256xf32>,
    return
  }
  func.func @transform_0(%arg0: i32) -> (i32, i32, i32) {
    %c0_i32 = arith.constant 0 : i32
    %c0_i32_0 = arith.constant 0 : i32
    %c0_i32_1 = arith.constant 0 : i32
    return %arg0, %c0_i32, %c0_i32_0 : i32, i32, i32
  }
  func.func @transform_1(%arg0: i32) -> (i32, i32, i32) {
    %c0_i32 = arith.constant 0 : i32
    %c0_i32_0 = arith.constant 0 : i32
    %c0_i32_1 = arith.constant 0 : i32
    return %arg0, %c0_i32, %c0_i32_0 : i32, i32, i32
  }
}

</mosaic_0001>

<llo_original>
// kernel: tpu_custom_call.1
$region0: #{tpu_custom_call.1}
  #allocation0 [shape = 'u32[]', space=smem, size = 0x4, offset = 0x4, fixed_abs, tag = 'smem constant byte address 0x4 - core index']
  #allocation1 [shape = 'u32[144,128]{1,0:T(1,128)}', space=vmem, size = 0x12000, scoped, tag = 'internal scratch']
  %s0 = inlined_call_operand.hbm [shape: f32[2,4,256], index: 0, kind: input, shape index: {}]
  %s1 = inlined_call_operand.hbm [shape: f32[2,8,256], index: 1, kind: output, shape index: {}]
  %s2 = sld [smem:[#allocation0]]
  $region18: #{tpu_custom_call.1} parent=0
    _
  %s4 = ssub.s32 1, %s2
  %s5 = scalar_select 0, %s4, %s2
  $region1: #{tpu_custom_call.1} parent=0
    #allocation2 [shape = 'u8[8192]{0}', space=vmem, size = 0x2000, scoped, tag = 'input window, operand 0, single buffered']
    #allocation3 [shape = 's32[1]{0}', space=sflag, size = 0x4, scoped, tag = 'scoped memory for tpu_custom_call.1']
    #allocation4 [shape = 's32[1]{0}', space=sflag, size = 0x4, scoped, tag = 'scoped memory for tpu_custom_call.1']
    #allocation5 [shape = 'u8[16384]{0}', space=vmem, size = 0x4000, scoped, tag = 'output window, operand 0, single buffered']
    %6 = vsyncpa [#allocation3], 0
    %7 = vsyncpa [#allocation4], 0
    // Predicated region
    $region2: #{tpu_custom_call.1} parent=1 // pred_check
      _
    $region3: #{tpu_custom_call.1} parent=1 // pred_check_branch
      %9 = sbr.rel (0) target = $region5
    $region4: #{tpu_custom_call.1} parent=1 // pred_region
      %s11 = ssub.s32 256, 256
      %12 = vsyncadd [#allocation3], %s11
      %s13 = sshll.u32 [#allocation2], 4
      %s14 = int_to_ptr.vmem [resolvable:$true] %s13
      %19 = dma.hbm_to_vmem [thread:$0]  %s0, 256, %s14, [#allocation3], 128, 128, 8
    $region5: #{tpu_custom_call.1} parent=1 // pred_fallthru
      _
    // Predicated region
    $region6: #{tpu_custom_call.1} parent=1 // pred_check
      _
    $region7: #{tpu_custom_call.1} parent=1 // pred_check_branch
      %21 = sbr.rel (0) target = $region9
    $region8: #{tpu_custom_call.1} parent=1 // pred_region
      %22 = dma.done [#allocation3], 256
    $region9: #{tpu_custom_call.1} parent=1 // pred_fallthru
      _
    %v23 = vld [vmem:[#allocation2] sm:$0xff]
    %v24 = vld [vmem:[#allocation2 + $0x8] sm:$0xff]
    %v27 = vcombine.high %v23, %v23
    %v28 = vcombine.high %v24, %v24
    %vm31 = vcmask 1043456
    %v32 = vsel %vm31, %v23, 0.0
    %v33 = vrot.slane %v32, 4
    %v34 = vadd.f32 %v32, %v33
    %v35 = vrot.slane %v34, 2
    %v36 = vadd.f32 %v34, %v35
    %v37 = vrot.slane %v36, 1
    %v38 = vadd.f32 %v36, %v37
    %v39 = vsel %vm31, %v27, 0.0
    %v40 = vrot.slane %v39, 4
    %v41 = vadd.f32 %v39, %v40
    %v42 = vrot.slane %v41, 2
    %v43 = vadd.f32 %v41, %v42
    %v44 = vrot.slane %v43, 1
    %v45 = vadd.f32 %v43, %v44
    %v46 = vsel %vm31, %v24, 0.0
    %v47 = vrot.slane %v46, 4
    %v48 = vadd.f32 %v46, %v47
    %v49 = vrot.slane %v48, 2
    %v50 = vadd.f32 %v48, %v49
    %v51 = vrot.slane %v50, 1
    %v52 = vadd.f32 %v50, %v51
    %v53 = vsel %vm31, %v28, 0.0
    %v54 = vrot.slane %v53, 4
    %v55 = vadd.f32 %v53, %v54
    %v56 = vrot.slane %v55, 2
    %v57 = vadd.f32 %v55, %v56
    %v58 = vrot.slane %v57, 1
    %v59 = vadd.f32 %v57, %v58
    %v60 = vlaneseq
    %v61 = vand.u32 %v60, 127
    %v62 = vadd.s32 %v61, 128
    %v63 = vand.u32 %v61, 15
    %v64 = vand.u32 %v62, 15
    %vm65 = vcmp.ge.s32.totalorder %v61, 240
    %vm66 = vcmp.ge.s32.totalorder %v62, 240
    %vm71 = vcmask 1041409
    %v72 = vsel %vm71, %v52, %v38
    %v73 = vsel %vm71, %v59, %v45
    %76 = vrot.lane.b32.xlu0 %v72, 112
    %v77 = vpop.permute.xlu0 %76
    %78 = vrot.lane.b32.xlu0 %v73, 112
    %v79 = vpop.permute.xlu0 %78
    %vm80 = vcmp.lt.s32.totalorder %v61, 112
    %v81 = vsel %vm80, %v77, %v79
    %v82 = vsel %vm80, %v79, %v77
    %v83 = vsel %vm65, 1, 0
    %v84 = vsel %vm66, 1, 0
    %vm85 = vcmp.eq.s32.totalorder %v83, 1
    %vm86 = vcmp.eq.s32.totalorder %v84, 1
    %v87 = vsel %vm85, 0.0, %v81
    %v88 = vsel %vm86, 0.0, %v82
    %vm89 = vcmp.lt.s32.totalorder %v61, 16
    %vm90 = vcmp.lt.s32.totalorder %v62, 16
    %91 = vrot.lane.b32.xlu0 %v72, 16
    %v92 = vpop.permute.xlu0 %91
    %93 = vrot.lane.b32.xlu0 %v73, 16
    %v94 = vpop.permute.xlu0 %93
    %v95 = vsel %vm89, %v92, %v94
    %v96 = vsel %vm89, %v94, %v92
    %v97 = vsel %vm89, 1, 0
    %v98 = vsel %vm90, 1, 0
    %vm99 = vcmp.eq.s32.totalorder %v97, 1
    %vm100 = vcmp.eq.s32.totalorder %v98, 1
    %v101 = vsel %vm99, 0.0, %v96
    %v102 = vsel %vm100, 0.0, %v95
    %v103 = vsub.f32 %v87, %v101
    %v104 = vsub.f32 %v88, %v102
    %vm105 = vcmp.eq.s32.totalorder %v63, 15
    %vm106 = vcmp.eq.s32.totalorder %v64, 15
    %107 = vrot.lane.b32.xlu0 %v72, 127
    %v108 = vpop.permute.xlu0 %107
    %109 = vrot.lane.b32.xlu0 %v73, 127
    %v110 = vpop.permute.xlu0 %109
    %vm111 = vcmp.lt.s32.totalorder %v61, 127
    %v112 = vsel %vm111, %v108, %v110
    %v113 = vsel %vm111, %v110, %v108
    %v114 = vsel %vm105, 1, 0
    %v115 = vsel %vm106, 1, 0
    %vm116 = vcmp.eq.s32.totalorder %v114, 1
    %vm117 = vcmp.eq.s32.totalorder %v115, 1
    %v118 = vsel %vm116, 0.0, %v112
    %v119 = vsel %vm117, 0.0, %v113
    %vm120 = vcmp.eq.s32.totalorder %v63, 0
    %vm121 = vcmp.eq.s32.totalorder %v64, 0
    %122 = vrot.lane.b32.xlu0 %v72, 1
    %v123 = vpop.permute.xlu0 %122
    %124 = vrot.lane.b32.xlu0 %v73, 1
    %v125 = vpop.permute.xlu0 %124
    %vm126 = vcmp.lt.s32.totalorder %v61, 1
    %v127 = vsel %vm126, %v123, %v125
    %v128 = vsel %vm126, %v125, %v123
    %v129 = vsel %vm120, 1, 0
    %v130 = vsel %vm121, 1, 0
    %vm131 = vcmp.eq.s32.totalorder %v129, 1
    %vm132 = vcmp.eq.s32.totalorder %v130, 1
    %v133 = vsel %vm131, 0.0, %v128
    %v134 = vsel %vm132, 0.0, %v127
    %v135 = vsub.f32 %v118, %v133
    %v136 = vsub.f32 %v119, %v134
    %v137 = vmul.f32 %v103, %v103
    %v138 = vmul.f32 %v104, %v104
    %v139 = vmul.f32 %v135, %v135
    %v140 = vmul.f32 %v136, %v136
    %v141 = vadd.f32 %v137, %v139
    %v142 = vadd.f32 %v138, %v140
    %v143 = vrsqrt.pop %v141
    %v144 = vmul.f32 %v141, %v143
    %vm145 = vcmp.eq.f32.partialorder %v141, inf
    %v146 = vsel %vm145, %v141, %v144
    %vm147 = vcmp.eq.f32.partialorder %v141, 0.0
    %v148 = vand.u32 %v141, 2147483648
    %v149 = vsel %vm147, %v148, %v146
    %v150 = vrsqrt.pop %v142
    %v151 = vmul.f32 %v142, %v150
    %vm152 = vcmp.eq.f32.partialorder %v142, inf
    %v153 = vsel %vm152, %v142, %v151
    %vm154 = vcmp.eq.f32.partialorder %v142, 0.0
    %v155 = vand.u32 %v142, 2147483648
    %v156 = vsel %vm154, %v155, %v153
    %v159 = vcombine.low %v149, %v156
    %v161 = vunpack.c.l.s4 1966171168
    %v162 = vunpack.c.0.s8 %v161
    %v163 = vlaneseq
    %v164 = vshrl.u32 %v163, 7
    %v165 = vsub.s32 %v162, %v164
    %v166 = vrot.slane %v159, %v165
    %v167 = vcombine.high %v166, %v166
    %v169 = vunpack.c.l.s4 1966171168
    %v170 = vunpack.c.0.s8 %v169
    %v171 = vlaneseq
    %v172 = vshrl.u32 %v171, 7
    %v173 = vsub.s32 %v170, %v172
    %v174 = vrot.slane %v166, %v173
    %v176 = vunpack.c.l.s4 1966171168
    %v177 = vunpack.c.0.s8 %v176
    %v178 = vlaneseq
    %v179 = vshrl.u32 %v178, 7
    %v180 = vsub.s32 %v177, %v179
    %v181 = vrot.slane %v167, %v180
    %v182 = vlaneseq
    %v183 = vshrl.u32 %v182, 7
    %v184 = vsub.s32 0, %v183
    %v185 = vrot.slane %v174, %v184
    %v186 = vlaneseq
    %v187 = vshrl.u32 %v186, 7
    %v188 = vsub.s32 1, %v187
    %v189 = vrot.slane %v174, %v188
    %v190 = vlaneseq
    %v191 = vshrl.u32 %v190, 7
    %v192 = vsub.s32 0, %v191
    %v193 = vrot.slane %v181, %v192
    %v194 = vlaneseq
    %v195 = vshrl.u32 %v194, 7
    %v196 = vsub.s32 1, %v195
    %v197 = vrot.slane %v181, %v196
    %202 = vst [vmem:[#allocation5] sm:$0xff] %v185
    %203 = vst [vmem:[#allocation5 + $0x8] sm:$0xff] %v189
    %204 = vst [vmem:[#allocation5 + $0x10] sm:$0xff] %v193
    %205 = vst [vmem:[#allocation5 + $0x18] sm:$0xff] %v197
    // Predicated region
    $region10: #{tpu_custom_call.1} parent=1 // pred_check
      _
    $region11: #{tpu_custom_call.1} parent=1 // pred_check_branch
      %207 = sbr.rel (0) target = $region13
    $region12: #{tpu_custom_call.1} parent=1 // pred_region
      %s209 = ssub.s32 512, 512
      %210 = vsyncadd [#allocation4], %s209
      %s211 = sshll.u32 [#allocation5], 4
      %s212 = int_to_ptr.vmem [resolvable:$true] %s211
      %217 = dma.vmem_to_hbm [thread:$0]  %s212, 512, %s1, [#allocation4], 256, 256, 16
    $region13: #{tpu_custom_call.1} parent=1 // pred_fallthru
      _
    // Predicated region
    $region14: #{tpu_custom_call.1} parent=1 // pred_check
      _
    $region15: #{tpu_custom_call.1} parent=1 // pred_check_branch
      %219 = sbr.rel (0) target = $region17
    $region16: #{tpu_custom_call.1} parent=1 // pred_region
      %220 = dma.done [#allocation4], 512
    $region17: #{tpu_custom_call.1} parent=1 // pred_fallthru
      _
    %221 = vsyncpa [#allocation3], 1
    %222 = vsyncpa [#allocation4], 1

</llo_original>
